<compile_context>
chip_gen: v7x
topology: tpu7x:2x2x1
jax: 0.10.0
libtpu: 0.0.40
codegen_flags: <defaults>
</compile_context>

<pallas_src>
import jax
import jax.numpy as jnp
from jax import lax
from jax.experimental import pallas as pl
from jax.experimental.pallas import tpu as pltpu

LANE = 128


def _round_up(x, m):
    return ((x + m - 1) // m) * m


def _mlp_attention(sum_acc, max_acc, w1_ref, w2_ref, hw):
    """(C,128) f32 partial sum / partial max -> (C,1) f32 channel attention."""
    avg = jnp.sum(sum_acc, axis=-1, keepdims=True) * (1.0 / hw)          # (C, 1)
    mx = jnp.max(max_acc, axis=-1, keepdims=True)                        # (C, 1)
    pooled = jnp.concatenate([avg, mx], axis=-1)                         # (C, 2)
    w1 = w1_ref[...].astype(jnp.float32)                                 # (Cr, C)
    w2 = w2_ref[...].astype(jnp.float32)                                 # (C, Cr)
    h = jnp.maximum(jnp.dot(w1, pooled, preferred_element_type=jnp.float32), 0.0)  # (Cr, 2)
    y = jnp.dot(w2, h, preferred_element_type=jnp.float32)               # (C, 2)
    # MLP(avg) + MLP(max), then sigmoid
    return jax.nn.sigmoid(jnp.sum(y, axis=-1, keepdims=True))            # (C, 1)


# ----------------------------------------------------------------------------
# Path A: fused whole-image kernel (1 read + 1 write of x), used when it fits.
# ----------------------------------------------------------------------------
def _make_fused_kernel(hw, hw_pad, chunk):
    n_chunks = hw_pad // chunk
    cols = chunk // LANE
    masked = hw_pad != hw

    def kernel(x_ref, w1_ref, w2_ref, o_ref):
        # x_ref/o_ref: (1, C, hw_pad);  w1_ref: (Cr, C);  w2_ref: (C, Cr)
        C = x_ref.shape[1]

        def acc_body(i, carry):
            s, m = carry
            base = pl.multiple_of(i * chunk, chunk)
            for j in range(cols):                       # static unroll of a few columns
                off = base + j * LANE
                col = x_ref[0, :, pl.ds(off, LANE)].astype(jnp.float32)   # (C, 128)
                if masked:
                    lane_idx = lax.broadcasted_iota(jnp.int32, (1, LANE), 1) + off
                    valid = lane_idx < hw
                    s = s + jnp.where(valid, col, 0.0)
                    m = jnp.maximum(m, jnp.where(valid, col, -jnp.inf))
                else:
                    s = s + col
                    m = jnp.maximum(m, col)
            return s, m

        init = (jnp.zeros((C, LANE), jnp.float32),
                jnp.full((C, LANE), -jnp.inf, jnp.float32))
        s_acc, m_acc = lax.fori_loop(0, n_chunks, acc_body, init)

        attn = _mlp_attention(s_acc, m_acc, w1_ref, w2_ref, hw)           # (C, 1) f32
        attn_c = attn.astype(o_ref.dtype)

        # chunk-wise multiply + store (keeps live ranges small, stays in x dtype)
        @pl.loop(0, n_chunks)
        def _(i):
            base = pl.multiple_of(i * chunk, chunk)
            o_ref[0, :, pl.ds(base, chunk)] = x_ref[0, :, pl.ds(base, chunk)] * attn_c

    return kernel


# ----------------------------------------------------------------------------
# Path B: tiled two-pass kernels (scales to arbitrary C*HW, v7x-friendly).
# ----------------------------------------------------------------------------
def _make_reduce_kernel(hw, tile):
    cols = tile // LANE
    masked = hw % tile != 0

    def kernel(x_ref, w1_ref, w2_ref, attn_ref, sum_sc, max_sc):
        # x_ref: (1, C, tile); attn_ref: (1, C, 1); sum_sc/max_sc: (C, 128) f32
        t = pl.program_id(1)

        @pl.when(t == 0)
        def _():
            sum_sc[...] = jnp.zeros_like(sum_sc)
            max_sc[...] = jnp.full_like(max_sc, -jnp.inf)

        base = t * tile
        s = sum_sc[...]
        m = max_sc[...]
        for j in range(cols):                            # static unroll (tile/128 columns)
            col = x_ref[0, :, j * LANE:(j + 1) * LANE].astype(jnp.float32)
            if masked:
                lane_idx = lax.broadcasted_iota(jnp.int32, (1, LANE), 1) + (base + j * LANE)
                valid = lane_idx < hw
                s = s + jnp.where(valid, col, 0.0)
                m = jnp.maximum(m, jnp.where(valid, col, -jnp.inf))
            else:
                s = s + col
                m = jnp.maximum(m, col)
        sum_sc[...] = s
        max_sc[...] = m

        # MLP + sigmoid only once per batch, at the last HW tile
        @pl.when(t == pl.num_programs(1) - 1)
        def _():
            attn = _mlp_attention(s, m, w1_ref, w2_ref, hw)               # (C, 1)
            attn_ref[0] = attn.astype(attn_ref.dtype)

    return kernel


def _mul_kernel(x_ref, attn_ref, o_ref):
    # x_ref/o_ref: (1, C, tile); attn_ref: (1, C, 1)
    o_ref[0] = x_ref[0] * attn_ref[0]


# ----------------------------------------------------------------------------
# Wrapper
# ----------------------------------------------------------------------------
def ca_module(x, w1, w2, *, hw_tile=512, vmem_limit_bytes=32 * 1024 * 1024,
              force_tiled=False):
    """x: (B, C, H, W); w1: (C//r, C); w2: (C, C//r). Returns (B, C, H, W)."""
    B, C, H, W = x.shape
    Cr = w1.shape[0]
    HW = H * W
    dtype = x.dtype
    itemsize = jnp.dtype(dtype).itemsize
    x_flat = x.reshape(B, C, HW)

    # ---- fused whole-image path (2 HBM passes) when blocks fit the VMEM budget
    chunk = 4 * LANE if HW >= 4 * LANE else _round_up(HW, LANE)
    hw_pad_f = _round_up(HW, chunk)
    # double-buffered input + output blocks (+weights) must fit scoped VMEM
    fused_bytes = 4 * C * hw_pad_f * itemsize + 4 * C * Cr * 4
    use_fused = (not force_tiled) and fused_bytes <= (6 * vmem_limit_bytes) // 10

    if use_fused:
        xp = jnp.pad(x_flat, ((0, 0), (0, 0), (0, hw_pad_f - HW)))
        out = pl.pallas_call(
            _make_fused_kernel(HW, hw_pad_f, chunk),
            out_shape=jax.ShapeDtypeStruct((B, C, hw_pad_f), dtype),
            grid_spec=pltpu.PrefetchScalarGridSpec(
                num_scalar_prefetch=0,
                grid=(B,),
                in_specs=[
                    pl.BlockSpec((1, C, hw_pad_f), lambda b: (b, 0, 0)),
                    pl.BlockSpec((Cr, C), lambda b: (0, 0)),
                    pl.BlockSpec((C, Cr), lambda b: (0, 0)),
                ],
                out_specs=pl.BlockSpec((1, C, hw_pad_f), lambda b: (b, 0, 0)),
            ),
            compiler_params=pltpu.CompilerParams(
                dimension_semantics=("parallel",),
                vmem_limit_bytes=vmem_limit_bytes,
            ),
            cost_estimate=pl.CostEstimate(
                flops=3 * B * C * HW + 4 * B * C * Cr,
                transcendentals=B * C,
                bytes_accessed=2 * B * C * hw_pad_f * itemsize,
            ),
        )(xp, w1, w2)
        return out[:, :, :HW].reshape(B, C, H, W)

    # ---- tiled two-pass path (3 HBM passes, bounded VMEM, deep pipeline)
    tile = _round_up(min(hw_tile, _round_up(HW, LANE)), LANE)
    hw_pad = _round_up(HW, tile)
    n_tiles = hw_pad // tile
    xp = jnp.pad(x_flat, ((0, 0), (0, 0), (0, hw_pad - HW)))

    attn = pl.pallas_call(
        _make_reduce_kernel(HW, tile),
        out_shape=jax.ShapeDtypeStruct((B, C, 1), dtype),
        grid_spec=pltpu.PrefetchScalarGridSpec(
            num_scalar_prefetch=0,
            grid=(B, n_tiles),
            in_specs=[
                pl.BlockSpec((1, C, tile), lambda b, t: (b, 0, t)),
                pl.BlockSpec((Cr, C), lambda b, t: (0, 0)),
                pl.BlockSpec((C, Cr), lambda b, t: (0, 0)),
            ],
            out_specs=pl.BlockSpec((1, C, 1), lambda b, t: (b, 0, 0)),
            scratch_shapes=[
                pltpu.VMEM((C, LANE), jnp.float32),   # running sum
                pltpu.VMEM((C, LANE), jnp.float32),   # running max
            ],
        ),
        compiler_params=pltpu.CompilerParams(
            dimension_semantics=("parallel", "arbitrary"),
            vmem_limit_bytes=vmem_limit_bytes,
        ),
        cost_estimate=pl.CostEstimate(
            flops=2 * B * C * HW + 4 * B * C * Cr,
            transcendentals=B * C,
            bytes_accessed=B * C * hw_pad * itemsize,
        ),
    )(xp, w1, w2)

    out = pl.pallas_call(
        _mul_kernel,
        out_shape=jax.ShapeDtypeStruct((B, C, hw_pad), dtype),
        grid_spec=pltpu.PrefetchScalarGridSpec(
            num_scalar_prefetch=0,
            grid=(B, n_tiles),
            in_specs=[
                pl.BlockSpec((1, C, tile), lambda b, t: (b, 0, t)),
                pl.BlockSpec((1, C, 1), lambda b, t: (b, 0, 0)),
            ],
            out_specs=pl.BlockSpec((1, C, tile), lambda b, t: (b, 0, t)),
        ),
        compiler_params=pltpu.CompilerParams(
            dimension_semantics=("parallel", "parallel"),
            vmem_limit_bytes=vmem_limit_bytes,
        ),
        cost_estimate=pl.CostEstimate(
            flops=B * C * HW,
            transcendentals=0,
            bytes_accessed=2 * B * C * hw_pad * itemsize,
        ),
    )(xp, attn)

    return out[:, :, :HW].reshape(B, C, H, W)


# ----------------------------------------------------------------------------
# Reference + tests
# ----------------------------------------------------------------------------
def _xavier_uniform(key, out_c, in_c):
    # PyTorch xavier_uniform_ for a (out_c, in_c, 1, 1) conv weight (squeezed).
    bound = (6.0 / (in_c + out_c)) ** 0.5
    return jax.random.uniform(key, (out_c, in_c), jnp.float32, -bound, bound)


def _reference(x, w1, w2):
    avg = jnp.mean(x, axis=(2, 3))                     # (B, C)
    mx = jnp.max(x, axis=(2, 3))                       # (B, C)

    def mlp(v):
        h = jnp.maximum(v @ w1.T, 0.0)
        return h @ w2.T

    attn = jax.nn.sigmoid(mlp(avg) + mlp(mx))
    return x * attn[:, :, None, None]


def _check(name, x, w1, w2, **kw):
    out = jax.block_until_ready(ca_module(x, w1, w2, **kw))
    ref = _reference(x, w1, w2)
    err = float(jnp.max(jnp.abs(out - ref)))
    assert jnp.allclose(out, ref, atol=1e-4, rtol=1e-4), f"{name}: mismatch (max abs err {err:.3e})"


if __name__ == "__main__":
    key = jax.random.PRNGKey(0)

    # case 1/2: small image -> fused path, and the same inputs forced down the tiled path
    k1, k2, k3, key = jax.random.split(key, 4)
    B, C, H, W, r = 2, 32, 16, 16, 4
    x = jax.random.normal(k1, (B, C, H, W), jnp.float32)
    w1 = _xavier_uniform(k2, C // r, C)
    w2 = _xavier_uniform(k3, C, C // r)
    _check("fused", x, w1, w2)
    _check("tiled", x, w1, w2, force_tiled=True)

    # case 3: HW=49 (not a multiple of 128) with all-negative values
    # -> padded lanes must be masked out of the max-pool on both paths
    k1, k2, k3, key = jax.random.split(key, 4)
    B, C, H, W, r = 2, 32, 7, 7, 4
    x = -jnp.abs(jax.random.normal(k1, (B, C, H, W), jnp.float32)) - 1.0
    w1 = _xavier_uniform(k2, C // r, C)
    w2 = _xavier_uniform(k3, C, C // r)
    _check("fused_masked", x, w1, w2)
    _check("tiled_masked", x, w1, w2, force_tiled=True)

    # case 4: tiled path with multiple HW tiles per batch, partial last tile, B=1
    k1, k2, k3, key = jax.random.split(key, 4)
    B, C, H, W, r = 1, 64, 23, 9, 8
    x = jax.random.normal(k1, (B, C, H, W), jnp.float32) - 2.0
    w1 = _xavier_uniform(k2, C // r, C)
    w2 = _xavier_uniform(k3, C, C // r)
    _check("tiled_multitile", x, w1, w2, force_tiled=True, hw_tile=128)

    print("KERNEL_OK")
</pallas_src>

<mosaic_0001>
module attributes {stable_mosaic.version = 11 : i64} {
  func.func @kernel(%arg0: i32, %arg1: memref<1x32x256xf32, #tpu.memory_space<vmem>>, %arg2: memref<8x32xf32, #tpu.memory_space<vmem>>, %arg3: memref<32x8xf32, #tpu.memory_space<vmem>>, %arg4: memref<1x32x256xf32, #tpu.memory_space<vmem>>) attributes {dimension_semantics = [#tpu.dimension_semantics<parallel>], iteration_bounds = array<i64: 2>, scalar_prefetch = 0 : i64, scratch_operands = 0 : i64, tpu.core_type = #tpu.core_type<tc>, window_params = [{transform_indices = @transform_0, window_bounds = array<i64: 1, 32, 256>}, {pipeline_mode = #tpu.pipeline_mode<synchronous>, transform_indices = @transform_1, window_bounds = array<i64: 8, 32>}, {pipeline_mode = #tpu.pipeline_mode<synchronous>, transform_indices = @transform_2, window_bounds = array<i64: 32, 8>}, {transform_indices = @transform_3, window_bounds = array<i64: 1, 32, 256>}]} {
    %cst = arith.constant 0.000000e+00 : f32
    %0 = vector.broadcast %cst : f32 to vector<32x128xf32>
    %cst_0 = arith.constant 0xFF800000 : f32
    %1 = vector.broadcast %cst_0 : f32 to vector<32x128xf32>
    %c0_i32 = arith.constant 0 : i32
    %c256_i32 = arith.constant 256 : i32
    %2 = arith.muli %c0_i32, %c256_i32 : i32
    %3 = tpu.assume_multiple %2, 256 : i32
    %c0_i32_1 = arith.constant 0 : i32
    %4 = arith.addi %3, %c0_i32_1 : i32
    %c0 = arith.constant 0 : index
    %c0_2 = arith.constant 0 : index
    %5 = arith.index_cast %4 : i32 to index
    %6 = vector.load %arg1[%c0, %c0_2, %5] : memref<1x32x256xf32, #tpu.memory_space<vmem>>, vector<1x32x128xf32>
    %7 = vector.shape_cast %6 : vector<1x32x128xf32> to vector<32x128xf32>
    %8 = arith.addf %0, %7 : vector<32x128xf32>
    %9 = arith.maximumf %1, %7 : vector<32x128xf32>
    %c128_i32 = arith.constant 128 : i32
    %10 = arith.addi %3, %c128_i32 : i32
    %c0_3 = arith.constant 0 : index
    %c0_4 = arith.constant 0 : index
    %11 = arith.index_cast %10 : i32 to index
    %12 = vector.load %arg1[%c0_3, %c0_4, %11] : memref<1x32x256xf32, #tpu.memory_space<vmem>>, vector<1x32x128xf32>
    %13 = vector.shape_cast %12 : vector<1x32x128xf32> to vector<32x128xf32>
    %14 = arith.addf %8, %13 : vector<32x128xf32>
    %15 = arith.maximumf %9, %13 : vector<32x128xf32>
    %c1_i32 = arith.constant 1 : i32
    %cst_5 = arith.constant dense<0.000000e+00> : vector<32xf32>
    %16 = vector.multi_reduction <add>, %14, %cst_5 [1] : vector<32x128xf32> to vector<32xf32>
    %17 = vector.shape_cast %16 : vector<32xf32> to vector<32x1xf32>
    %cst_6 = arith.constant 3.906250e-03 : f32
    %18 = vector.broadcast %cst_6 : f32 to vector<32x1xf32>
    %19 = arith.mulf %17, %18 : vector<32x1xf32>
    %cst_7 = arith.constant dense<0xFF800000> : vector<32xf32>
    %20 = vector.multi_reduction <maximumf>, %15, %cst_7 [1] : vector<32x128xf32> to vector<32xf32>
    %21 = vector.shape_cast %20 : vector<32xf32> to vector<32x1xf32>
    %22 = tpu.concatenate %19, %21 in 1 : vector<32x1xf32>, vector<32x1xf32> -> vector<32x2xf32>
    %c0_8 = arith.constant 0 : index
    %c0_9 = arith.constant 0 : index
    %23 = vector.load %arg2[%c0_8, %c0_9] : memref<8x32xf32, #tpu.memory_space<vmem>>, vector<8x32xf32>
    %c0_10 = arith.constant 0 : index
    %c0_11 = arith.constant 0 : index
    %24 = vector.load %arg3[%c0_10, %c0_11] : memref<32x8xf32, #tpu.memory_space<vmem>>, vector<32x8xf32>
    %cst_12 = arith.constant dense<0.000000e+00> : vector<8x2xf32>
    %25 = tpu.matmul %23, %22, %cst_12 {dimension_numbers = #tpu.dot_dimension_numbers<[1], [0], [0], [1], [0, 0, 1, 1], [], []>} : vector<8x32xf32>, vector<32x2xf32>, vector<8x2xf32> -> vector<8x2xf32>
    %cst_13 = arith.constant 0.000000e+00 : f32
    %26 = vector.broadcast %cst_13 : f32 to vector<8x2xf32>
    %27 = arith.maximumf %25, %26 : vector<8x2xf32>
    %cst_14 = arith.constant dense<0.000000e+00> : vector<32x2xf32>
    %28 = tpu.matmul %24, %27, %cst_14 {dimension_numbers = #tpu.dot_dimension_numbers<[1], [0], [0], [1], [0, 0, 1, 1], [], []>} : vector<32x8xf32>, vector<8x2xf32>, vector<32x2xf32> -> vector<32x2xf32>
    %cst_15 = arith.constant dense<0.000000e+00> : vector<32xf32>
    %29 = vector.multi_reduction <add>, %28, %cst_15 [1] : vector<32x2xf32> to vector<32xf32>
    %30 = vector.shape_cast %29 : vector<32xf32> to vector<32x1xf32>
    %31 = arith.negf %30 : vector<32x1xf32>
    %32 = math.exp %31 : vector<32x1xf32>
    %cst_16 = arith.constant 1.000000e+00 : f32
    %33 = vector.broadcast %cst_16 : f32 to vector<32x1xf32>
    %34 = arith.addf %33, %32 : vector<32x1xf32>
    %35 = arith.divf %33, %34 : vector<32x1xf32>
    %c0_i32_17 = arith.constant 0 : i32
    %c1_i32_18 = arith.constant 1 : i32
    %36 = arith.muli %c0_i32_17, %c1_i32_18 : i32
    %c0_i32_19 = arith.constant 0 : i32
    %37 = arith.addi %c0_i32_19, %36 : i32
    %c256_i32_20 = arith.constant 256 : i32
    %38 = arith.muli %37, %c256_i32_20 : i32
    %39 = tpu.assume_multiple %38, 256 : i32
    %c0_21 = arith.constant 0 : index
    %c0_22 = arith.constant 0 : index
    %40 = arith.index_cast %39 : i32 to index
    %41 = vector.load %arg1[%c0_21, %c0_22, %40] : memref<1x32x256xf32, #tpu.memory_space<vmem>>, vector<1x32x256xf32>
    %42 = vector.shape_cast %41 : vector<1x32x256xf32> to vector<32x256xf32>
    %43 = vector.broadcast %35 : vector<32x1xf32> to vector<32x256xf32>
    %44 = arith.mulf %42, %43 : vector<32x256xf32>
    %c0_23 = arith.constant 0 : index
    %c0_24 = arith.constant 0 : index
    %45 = arith.index_cast %39 : i32 to index
    %46 = vector.load %arg4[%c0_23, %c0_24, %45] : memref<1x32x256xf32, #tpu.memory_space<vmem>>, vector<1x32x256xf32>
    %47 = vector.shape_cast %46 : vector<1x32x256xf32> to vector<32x256xf32>
    %48 = vector.shape_cast %44 : vector<32x256xf32> to vector<1x32x256xf32>
    tpu.vector_store %arg4[%c0_23, %c0_24, %45], %48 {strides = array<i32>} : memref<1x32x256xf32, #tpu.memory_space<vmem>>, vector<1x32x256xf32>,
    %c1_i32_25 = arith.constant 1 : i32
    return
  }
  func.func @transform_0(%arg0: i32) -> (i32, i32, i32) {
    %c0_i32 = arith.constant 0 : i32
    %c0_i32_0 = arith.constant 0 : i32
    %c0_i32_1 = arith.constant 0 : i32
    return %arg0, %c0_i32, %c0_i32_0 : i32, i32, i32
  }
  func.func @transform_1(%arg0: i32) -> (i32, i32) {
    %c0_i32 = arith.constant 0 : i32
    %c0_i32_0 = arith.constant 0 : i32
    %c0_i32_1 = arith.constant 0 : i32
    return %c0_i32, %c0_i32_0 : i32, i32
  }
  func.func @transform_2(%arg0: i32) -> (i32, i32) {
    %c0_i32 = arith.constant 0 : i32
    %c0_i32_0 = arith.constant 0 : i32
    %c0_i32_1 = arith.constant 0 : i32
    return %c0_i32, %c0_i32_0 : i32, i32
  }
  func.func @transform_3(%arg0: i32) -> (i32, i32, i32) {
    %c0_i32 = arith.constant 0 : i32
    %c0_i32_0 = arith.constant 0 : i32
    %c0_i32_1 = arith.constant 0 : i32
    return %arg0, %c0_i32, %c0_i32_0 : i32, i32, i32
  }
}

</mosaic_0001>

<llo_original>
// kernel: tpu_custom_call.1
$region0: #{tpu_custom_call.1}
  #allocation0 [shape = 'u32[]', space=smem, size = 0x4, offset = 0x4, fixed_abs, tag = 'smem constant byte address 0x4 - core index']
  #allocation1 [shape = 'u32[144,128]{1,0:T(1,128)}', space=vmem, size = 0x12000, scoped, tag = 'internal scratch']
  %s0 = inlined_call_operand.hbm [shape: f32[2,32,256], index: 0, kind: input, shape index: {}]
  %s1 = inlined_call_operand.vmem [shape: f32[8,32], index: 1, kind: input, shape index: {}]
  %s2 = inlined_call_operand.vmem [shape: f32[32,8], index: 2, kind: input, shape index: {}]
  %s3 = inlined_call_operand.hbm [shape: f32[2,32,256], index: 3, kind: output, shape index: {}]
  %s4 = sld [smem:[#allocation0]]
  $region49: #{tpu_custom_call.1} parent=0
    _
  %s6 = ssub.s32 1, %s4
  %s7 = scalar_select 0, %s6, %s4
  $region1: #{tpu_custom_call.1} parent=0
    #allocation2 [shape = 'u8[65536]{0}', space=vmem, size = 0x10000, scoped, tag = 'input window, operand 0']
    #allocation3 [shape = 's32[2]{0}', space=sflag, size = 0x8, scoped, tag = 'scoped memory for tpu_custom_call.1']
    #allocation4 [shape = 's32[2]{0}', space=sflag, size = 0x8, scoped, tag = 'scoped memory for tpu_custom_call.1']
    #allocation5 [shape = 'u8[65536]{0}', space=vmem, size = 0x10000, scoped, tag = 'output window, operand 0']
    %8 = vsyncpa [#allocation3], 0
    %s9 = scalar_lea.sflag [#allocation3], 1
    %10 = vsyncpa %s9, 0
    %11 = vsyncpa [#allocation4], 0
    %s12 = scalar_lea.sflag [#allocation4], 1
    %13 = vsyncpa %s12, 0
    loop: start=0, step=1, limit=4
    $region2: #{tpu_custom_call.1} parent=1 // loop_pre_header
      _
    $region3: #{tpu_custom_call.1} parent=1 // loop_header
      %s15 = sphi 0, %s19
      %p16 = scmp.ge.s32.totalorder %s15, 4
      %s25 = sphi 0, %s27
      %s28 = sphi 0, %s25
      %s29 = sphi 0, %s28
      %s45 = sphi 0, %s29
      %s49 = sphi 0, %s49
      %s51 = sphi 0, %s49
      %s52 = sphi 0, %s51
      %s66 = sphi 0, %s52
      %s70 = sphi 0, %s70
      %s72 = sphi 0, %s70
      %s73 = sphi 0, %s72
      %s87 = sphi 0, %s73
      %s93 = sphi 0, %s95
      %s96 = sphi 0, %s93
      %s97 = sphi 0, %s96
      %s113 = sphi 0, %s97
    $region4: #{tpu_custom_call.1} parent=1 // loop_header_branch
      %18 = sbr.rel (%p16) target = $region8
    $region5: #{tpu_custom_call.1} parent=1 // loop_body
      %s20 = ssub.s32 %s15, 1
      %s21 = ssub.s32 %s15, 2
      %s22 = sadd.s32 %s15, 1
      %s23 = ssub.s32 %s15, %s22
      %p24 = scmp.eq.s32.totalorder %s23, 0
      %s26 = sadd.s32 %s25, 1
      %s27 = scalar_select %p24, %s25, %s26
      %p30 = pneg %p24
      %p31 = scmp.eq.s32.totalorder %s15, 1
      %p32 = por %p30, %p31
      %p33 = scmp.ne.s32.totalorder %s25, %s28
      %p34 = scmp.eq.s32.totalorder %s15, 0
      %p35 = por %p33, %p34
      %p36 = scmp.ne.s32.totalorder %s25, %s28
      %p37 = scmp.eq.s32.totalorder %s20, 1
      %p38 = por %p36, %p37
      %p39 = scmp.ne.s32.totalorder %s28, %s29
      %p40 = scmp.eq.s32.totalorder %s20, 0
      %p41 = por %p39, %p40
      %p42 = scmp.ne.s32.totalorder %s28, %s29
      %p43 = scmp.eq.s32.totalorder %s21, 1
      %p44 = por %p42, %p43
      %p46 = scmp.ne.s32.totalorder %s29, %s45
      %p47 = scmp.eq.s32.totalorder %s21, 0
      %p48 = por %p46, %p47
      %s50 = sadd.s32 %s49, 1
      %p53 = scmp.eq.s32.totalorder %s15, 1
      %p54 = scmp.ne.s32.totalorder %s49, %s51
      %p55 = scmp.eq.s32.totalorder %s15, 0
      %p56 = por %p54, %p55
      %p57 = scmp.ne.s32.totalorder %s49, %s51
      %p58 = scmp.eq.s32.totalorder %s20, 1
      %p59 = por %p57, %p58
      %p60 = scmp.ne.s32.totalorder %s51, %s52
      %p61 = scmp.eq.s32.totalorder %s20, 0
      %p62 = por %p60, %p61
      %p63 = scmp.ne.s32.totalorder %s51, %s52
      %p64 = scmp.eq.s32.totalorder %s21, 1
      %p65 = por %p63, %p64
      %p67 = scmp.ne.s32.totalorder %s52, %s66
      %p68 = scmp.eq.s32.totalorder %s21, 0
      %p69 = por %p67, %p68
      %s71 = sadd.s32 %s70, 1
      %p74 = scmp.eq.s32.totalorder %s15, 1
      %p75 = scmp.ne.s32.totalorder %s70, %s72
      %p76 = scmp.eq.s32.totalorder %s15, 0
      %p77 = por %p75, %p76
      %p78 = scmp.ne.s32.totalorder %s70, %s72
      %p79 = scmp.eq.s32.totalorder %s20, 1
      %p80 = por %p78, %p79
      %p81 = scmp.ne.s32.totalorder %s72, %s73
      %p82 = scmp.eq.s32.totalorder %s20, 0
      %p83 = por %p81, %p82
      %p84 = scmp.ne.s32.totalorder %s72, %s73
      %p85 = scmp.eq.s32.totalorder %s21, 1
      %p86 = por %p84, %p85
      %p88 = scmp.ne.s32.totalorder %s73, %s87
      %p89 = scmp.eq.s32.totalorder %s21, 0
      %p90 = por %p88, %p89
      %s91 = ssub.s32 %s15, %s22
      %p92 = scmp.eq.s32.totalorder %s91, 0
      %s94 = sadd.s32 %s93, 1
      %s95 = scalar_select %p92, %s93, %s94
      %p98 = pneg %p92
      %p99 = scmp.eq.s32.totalorder %s15, 1
      %p100 = por %p98, %p99
      %p101 = scmp.ne.s32.totalorder %s93, %s96
      %p102 = scmp.eq.s32.totalorder %s15, 0
      %p103 = por %p101, %p102
      %p104 = scmp.ne.s32.totalorder %s93, %s96
      %p105 = scmp.eq.s32.totalorder %s20, 1
      %p106 = por %p104, %p105
      %p107 = scmp.ne.s32.totalorder %s96, %s97
      %p108 = scmp.eq.s32.totalorder %s20, 0
      %p109 = por %p107, %p108
      %p110 = scmp.ne.s32.totalorder %s96, %s97
      %p111 = scmp.eq.s32.totalorder %s21, 1
      %p112 = por %p110, %p111
      %p114 = scmp.ne.s32.totalorder %s97, %s113
      %p115 = scmp.eq.s32.totalorder %s21, 0
      %p116 = por %p114, %p115
      %p117 = scmp.le.s32.totalorder 1, %s15
      %p118 = scmp.lt.s32.totalorder %s15, 3
      %p119 = pnand %p117, %p118
      %p120 = pneg %p119
      // Predicated region
      $region9: #{tpu_custom_call.1} parent=5 // pred_check
        _
      $region10: #{tpu_custom_call.1} parent=5 // pred_check_branch
        %122 = sbr.rel (%p119) target = $region12
      $region11: #{tpu_custom_call.1} parent=5 // pred_region
        %s123 = ssub.s32 %s15, 1
        // Predicated region
        $region13: #{tpu_custom_call.1} parent=11 // pred_check
          %p124 = pneg %p62
        $region14: #{tpu_custom_call.1} parent=11 // pred_check_branch
          %126 = sbr.rel (%p124) target = $region16
        $region15: #{tpu_custom_call.1} parent=11 // pred_region
          _
        $region16: #{tpu_custom_call.1} parent=11 // pred_fallthru
          _
        // Predicated region
        $region17: #{tpu_custom_call.1} parent=11 // pred_check
          %p127 = pneg %p83
        $region18: #{tpu_custom_call.1} parent=11 // pred_check_branch
          %129 = sbr.rel (%p127) target = $region20
        $region19: #{tpu_custom_call.1} parent=11 // pred_region
          _
        $region20: #{tpu_custom_call.1} parent=11 // pred_fallthru
          _
      $region12: #{tpu_custom_call.1} parent=5 // pred_fallthru
        _
      %p130 = scmp.lt.s32.totalorder %s15, 2
      // Predicated region
      $region21: #{tpu_custom_call.1} parent=5 // pred_check
        %p131 = pneg %p130
      $region22: #{tpu_custom_call.1} parent=5 // pred_check_branch
        %133 = sbr.rel (%p131) target = $region24
      $region23: #{tpu_custom_call.1} parent=5 // pred_region
        // Predicated region
        $region25: #{tpu_custom_call.1} parent=23 // pred_check
          %p134 = pneg %p35
        $region26: #{tpu_custom_call.1} parent=23 // pred_check_branch
          %136 = sbr.rel (%p134) target = $region28
        $region27: #{tpu_custom_call.1} parent=23 // pred_region
          %s137 = sand.u32 %s25, 1
          %s138 = scalar_lea.sflag [#allocation3], %s137
          %s139 = sand.u32 %s25, 1
          %s140 = smul.addr %s139, 64
          %s141 = scalar_lea.vmem [#allocation2], %s140
          %s143 = ssub.s32 1024, 1024
          %144 = vsyncadd %s138, %s143
          %s145 = smul.addr %s15, 8
          %s146 = smul.addr %s145, 128
          %s147 = scalar_lea.hbm %s0, %s146
          %s148 = sshll.u32 %s141, 4
          %s149 = int_to_ptr.vmem [resolvable:$true] %s148
          %154 = dma.hbm_to_vmem [thread:$0]  %s147, 1024, %s149, %s138, 256, 256, 16
        $region28: #{tpu_custom_call.1} parent=23 // pred_fallthru
          _
      $region24: #{tpu_custom_call.1} parent=5 // pred_fallthru
        _
      %p155 = scmp.le.s32.totalorder 1, %s15
      %p156 = scmp.lt.s32.totalorder %s15, 3
      %p157 = pnand %p155, %p156
      %p158 = pneg %p157
      // Predicated region
      $region29: #{tpu_custom_call.1} parent=5 // pred_check
        _
      $region30: #{tpu_custom_call.1} parent=5 // pred_check_branch
        %160 = sbr.rel (%p157) target = $region32
      $region31: #{tpu_custom_call.1} parent=5 // pred_region
        %s161 = ssub.s32 %s15, 1
        %s162 = sand.u32 %s28, 1
        %s163 = scalar_lea.sflag [#allocation3], %s162
        %s164 = sand.u32 %s28, 1
        %s165 = smul.addr %s164, 64
        %s166 = scalar_lea.vmem [#allocation2], %s165
        // Predicated region
        $region33: #{tpu_custom_call.1} parent=31 // pred_check
          %p167 = pneg %p41
        $region34: #{tpu_custom_call.1} parent=31 // pred_check_branch
          %169 = sbr.rel (%p167) target = $region36
        $region35: #{tpu_custom_call.1} parent=31 // pred_region
          %170 = dma.done %s163, 1024
        $region36: #{tpu_custom_call.1} parent=31 // pred_fallthru
          _
        %s171 = sand.u32 %s28, 1
        %s172 = scalar_lea.sflag [#allocation3], %s171
        %s173 = sand.u32 %s28, 1
        %s174 = smul.addr %s173, 64
        %s175 = scalar_lea.vmem [#allocation2], %s174
        %p176 = pneg %p41
        %p177 = pneg %p38
        %p178 = pneg %p62
        %p179 = pneg %p59
        %p180 = pneg %p83
        %p181 = pneg %p80
        %p182 = pneg %p109
        %p183 = pneg %p106
        %s184 = sand.u32 %s96, 1
        %s185 = scalar_lea.sflag [#allocation4], %s184
        %s186 = sand.u32 %s96, 1
        %s187 = smul.addr %s186, 64
        %s188 = scalar_lea.vmem [#allocation5], %s187
        %v189 = vld [vmem:[%s166] sm:$0xff]
        %v190 = vld [vmem:[%s166 + $0x10] sm:$0xff]
        %v191 = vld [vmem:[%s166 + $0x20] sm:$0xff]
        %v192 = vld [vmem:[%s166 + $0x30] sm:$0xff]
        %v193 = vadd.f32 %v189, 0.0
        %v194 = vadd.f32 %v190, 0.0
        %v195 = vadd.f32 %v191, 0.0
        %v196 = vadd.f32 %v192, 0.0
        %s197 = sadd.s32 0, 128
        %s198 = sshra.s32 %s197, 7
        %s199 = sand.u32 %s197, 127
        %s200 = smul.addr %s198, 8
        %s201 = scalar_lea.vmem %s166, %s200 [#allocation2]
        %v202 = vld [vmem:[%s201] sm:$0xff]
        %v203 = vld [vmem:[%s201 + $0x10] sm:$0xff]
        %v204 = vld [vmem:[%s201 + $0x20] sm:$0xff]
        %v205 = vld [vmem:[%s201 + $0x30] sm:$0xff]
        %v206 = vadd.f32 %v193, %v202
        %v207 = vadd.f32 %v194, %v203
        %v208 = vadd.f32 %v195, %v204
        %v209 = vadd.f32 %v196, %v205
        %v210 = vmax.f32 %v189, %v202
        %v211 = vmax.f32 %v190, %v203
        %v212 = vmax.f32 %v191, %v204
        %v213 = vmax.f32 %v192, %v205
        %214 = vadd.xlane.f32.xlu0 %v206
        %v215 = vpop.xlane.xlu0 %214
        %216 = vadd.xlane.f32.xlu0 %v207
        %v217 = vpop.xlane.xlu0 %216
        %218 = vadd.xlane.f32.xlu0 %v208
        %v219 = vpop.xlane.xlu0 %218
        %220 = vadd.xlane.f32.xlu0 %v209
        %v221 = vpop.xlane.xlu0 %220
        %v222 = vmul.f32 %v215, 0.00390625
        %v223 = vmul.f32 %v217, 0.00390625
        %v224 = vmul.f32 %v219, 0.00390625
        %v225 = vmul.f32 %v221, 0.00390625
        %226 = vmax.xlane.f32.xlu0 %v210
        %v227 = vpop.xlane.xlu0 %226
        %228 = vmax.xlane.f32.xlu0 %v211
        %v229 = vpop.xlane.xlu0 %228
        %230 = vmax.xlane.f32.xlu0 %v212
        %v231 = vpop.xlane.xlu0 %230
        %232 = vmax.xlane.f32.xlu0 %v213
        %v233 = vpop.xlane.xlu0 %232
        %vm234 = vcmask 7168
        %v235 = vsel %vm234, %v222, %v227
        %v236 = vsel %vm234, %v223, %v229
        %v237 = vsel %vm234, %v224, %v231
        %v238 = vsel %vm234, %v225, %v233
        %v239 = vld [vmem:[%s1] sm:$0xff]
        %v240 = vld [vmem:[%s2] sm:$0xff]
        %v241 = vld [vmem:[%s2 + $0x8] sm:$0xff]
        %v242 = vld [vmem:[%s2 + $0x10] sm:$0xff]
        %v243 = vld [vmem:[%s2 + $0x18] sm:$0xff]
        %vm244 = vcmask 261120
        %v246 = vsel %vm244, %v239, 0
        %248 = vmatprep.subr.mxu0 0.0
        %249 = vmatpush1.msra.mxu0 %v235
        %250 = vmatprep.subr.mxu0 0.0
        %251 = vmatpush1.msra.mxu0 %v236
        %252 = vmatprep.subr.mxu0 0.0
        %253 = vmatpush1.msra.mxu0 %v237
        %254 = vmatprep.subr.mxu0 0.0
        %255 = vmatpush1.msra.mxu0 %v238
        %256 = vmatprep.subr.mxu0 0.0
        %257 = vmatpush1.msra.mxu0 0.0
        %258 = vmatprep.subr.mxu0 0.0
        %259 = vmatpush1.msra.mxu0 0.0
        %260 = vmatprep.subr.mxu0 0.0
        %261 = vmatpush1.msra.mxu0 0.0
        %262 = vmatprep.subr.mxu0 0.0
        %263 = vmatpush1.msra.mxu0 0.0
        %264 = vmatprep.subr.mxu0 0.0
        %265 = vmatpush1.msra.mxu0 0.0
        %266 = vmatprep.subr.mxu0 0.0
        %267 = vmatpush1.msra.mxu0 0.0
        %268 = vmatprep.subr.mxu0 0.0
        %269 = vmatpush1.msra.mxu0 0.0
        %270 = vmatprep.subr.mxu0 0.0
        %271 = vmatpush1.msra.mxu0 0.0
        %272 = vmatprep.subr.mxu0 0.0
        %273 = vmatpush1.msra.mxu0 0.0
        %274 = vmatprep.subr.mxu0 0.0
        %275 = vmatpush1.msra.mxu0 0.0
        %276 = vmatprep.subr.mxu0 0.0
        %277 = vmatpush1.msra.mxu0 0.0
        %278 = vmatprep.subr.mxu0 0.0
        %279 = vmatpush1.msra.mxu0 0.0
        %280 = vmatprep.subr.mxu0 0.0
        %281 = vmatpush1.msra.mxu0 0.0
        %282 = vmatprep.subr.mxu0 0.0
        %283 = vmatpush1.msra.mxu0 0.0
        %284 = vmatprep.subr.mxu0 0.0
        %285 = vmatpush1.msra.mxu0 0.0
        %286 = vmatprep.subr.mxu0 0.0
        %287 = vmatpush1.msra.mxu0 0.0
        %288 = vmatprep.subr.mxu0 0.0
        %289 = vmatpush1.msra.mxu0 0.0
        %290 = vmatprep.subr.mxu0 0.0
        %291 = vmatpush1.msra.mxu0 0.0
        %292 = vmatprep.subr.mxu0 0.0
        %293 = vmatpush1.msra.mxu0 0.0
        %294 = vmatprep.subr.mxu0 0.0
        %295 = vmatpush1.msra.mxu0 0.0
        %296 = vmatprep.subr.mxu0 0.0
        %297 = vmatpush1.msra.mxu0 0.0
        %298 = vmatprep.subr.mxu0 0.0
        %299 = vmatpush1.msra.mxu0 0.0
        %300 = vmatprep.subr.mxu0 0.0
        %301 = vmatpush1.msra.mxu0 0.0
        %302 = vmatprep.subr.mxu0 0.0
        %303 = vmatpush1.msra.mxu0 0.0
        %304 = vmatprep.subr.mxu0 0.0
        %305 = vmatpush1.msra.mxu0 0.0
        %306 = vmatprep.subr.mxu0 0.0
        %307 = vmatpush1.msra.mxu0 0.0
        %308 = vmatprep.subr.mxu0 0.0
        %309 = vmatpush1.msra.mxu0 0.0
        %310 = vmatprep.subr.mxu0 0.0
        %311 = vmatpush1.msra.mxu0 0.0
        %312 = vmatprep.mubr.f32.mxu0 0.0
        %313 = vmatmul.mubr.f32.gmra.mrb[0].mxu0 %v246
        %v314 = vpop.f32.mrb[0].mxu0
        %v315 = vadd.f32 0.0, %v314
        %v316 = vpop.f32.mrb[0].mxu0
        %317 = vdwg.mxu0
        %v318 = vmax.f32 %v315, 0.0
        %vm319 = vcmask 64512
        %v321 = vsel %vm319, %v240, 0
        %v324 = vsel %vm319, %v241, 0
        %v327 = vsel %vm319, %v242, 0
        %v330 = vsel %vm319, %v243, 0
        %332 = vmatprep.subr.mxu0 0.0
        %333 = vmatpush1.msra.mxu0 %v318
        %334 = vmatprep.subr.mxu0 0.0
        %335 = vmatpush1.msra.mxu0 0.0
        %336 = vmatprep.subr.mxu0 0.0
        %337 = vmatpush1.msra.mxu0 0.0
        %338 = vmatprep.subr.mxu0 0.0
        %339 = vmatpush1.msra.mxu0 0.0
        %340 = vmatprep.subr.mxu0 0.0
        %341 = vmatpush1.msra.mxu0 0.0
        %342 = vmatprep.subr.mxu0 0.0
        %343 = vmatpush1.msra.mxu0 0.0
        %344 = vmatprep.subr.mxu0 0.0
        %345 = vmatpush1.msra.mxu0 0.0
        %346 = vmatprep.subr.mxu0 0.0
        %347 = vmatpush1.msra.mxu0 0.0
        %348 = vmatprep.subr.mxu0 0.0
        %349 = vmatpush1.msra.mxu0 0.0
        %350 = vmatprep.subr.mxu0 0.0
        %351 = vmatpush1.msra.mxu0 0.0
        %352 = vmatprep.subr.mxu0 0.0
        %353 = vmatpush1.msra.mxu0 0.0
        %354 = vmatprep.subr.mxu0 0.0
        %355 = vmatpush1.msra.mxu0 0.0
        %356 = vmatprep.subr.mxu0 0.0
        %357 = vmatpush1.msra.mxu0 0.0
        %358 = vmatprep.subr.mxu0 0.0
        %359 = vmatpush1.msra.mxu0 0.0
        %360 = vmatprep.subr.mxu0 0.0
        %361 = vmatpush1.msra.mxu0 0.0
        %362 = vmatprep.subr.mxu0 0.0
        %363 = vmatpush1.msra.mxu0 0.0
        %364 = vmatprep.subr.mxu0 0.0
        %365 = vmatpush1.msra.mxu0 0.0
        %366 = vmatprep.subr.mxu0 0.0
        %367 = vmatpush1.msra.mxu0 0.0
        %368 = vmatprep.subr.mxu0 0.0
        %369 = vmatpush1.msra.mxu0 0.0
        %370 = vmatprep.subr.mxu0 0.0
        %371 = vmatpush1.msra.mxu0 0.0
        %372 = vmatprep.subr.mxu0 0.0
        %373 = vmatpush1.msra.mxu0 0.0
        %374 = vmatprep.subr.mxu0 0.0
        %375 = vmatpush1.msra.mxu0 0.0
        %376 = vmatprep.subr.mxu0 0.0
        %377 = vmatpush1.msra.mxu0 0.0
        %378 = vmatprep.subr.mxu0 0.0
        %379 = vmatpush1.msra.mxu0 0.0
        %380 = vmatprep.subr.mxu0 0.0
        %381 = vmatpush1.msra.mxu0 0.0
        %382 = vmatprep.subr.mxu0 0.0
        %383 = vmatpush1.msra.mxu0 0.0
        %384 = vmatprep.subr.mxu0 0.0
        %385 = vmatpush1.msra.mxu0 0.0
        %386 = vmatprep.subr.mxu0 0.0
        %387 = vmatpush1.msra.mxu0 0.0
        %388 = vmatprep.subr.mxu0 0.0
        %389 = vmatpush1.msra.mxu0 0.0
        %390 = vmatprep.subr.mxu0 0.0
        %391 = vmatpush1.msra.mxu0 0.0
        %392 = vmatprep.subr.mxu0 0.0
        %393 = vmatpush1.msra.mxu0 0.0
        %394 = vmatprep.subr.mxu0 0.0
        %395 = vmatpush1.msra.mxu0 0.0
        %396 = vmatprep.mubr.f32.mxu0 0.0
        %397 = vmatmul.mubr.f32.gmra.mrb[0].mxu0 %v321
        %v398 = vpop.f32.mrb[0].mxu0
        %v399 = vadd.f32 0.0, %v398
        %v400 = vpop.f32.mrb[0].mxu0
        %401 = vmatprep.mubr.f32.mxu0 0.0
        %402 = vmatmul.mubr.f32.gmra.mrb[0].mxu0 %v324
        %v403 = vpop.f32.mrb[0].mxu0
        %v404 = vadd.f32 0.0, %v403
        %v405 = vpop.f32.mrb[0].mxu0
        %406 = vmatprep.mubr.f32.mxu0 0.0
        %407 = vmatmul.mubr.f32.gmra.mrb[0].mxu0 %v327
        %v408 = vpop.f32.mrb[0].mxu0
        %v409 = vadd.f32 0.0, %v408
        %v410 = vpop.f32.mrb[0].mxu0
        %411 = vmatprep.mubr.f32.mxu0 0.0
        %412 = vmatmul.mubr.f32.gmra.mrb[0].mxu0 %v330
        %v413 = vpop.f32.mrb[0].mxu0
        %v414 = vadd.f32 0.0, %v413
        %v415 = vpop.f32.mrb[0].mxu0
        %416 = vdwg.mxu0
        %vm417 = vcmask 15360
        %v418 = vsel %vm417, %v399, 0.0
        %419 = vadd.xlane.f32.xlu0 %v418
        %v420 = vpop.xlane.xlu0 %419
        %v421 = vsel %vm417, %v404, 0.0
        %422 = vadd.xlane.f32.xlu0 %v421
        %v423 = vpop.xlane.xlu0 %422
        %v424 = vsel %vm417, %v409, 0.0
        %425 = vadd.xlane.f32.xlu0 %v424
        %v426 = vpop.xlane.xlu0 %425
        %v427 = vsel %vm417, %v414, 0.0
        %428 = vadd.xlane.f32.xlu0 %v427
        %v429 = vpop.xlane.xlu0 %428
        %v430 = vxor.u32 %v420, 2147483648
        %v431 = vxor.u32 %v423, 2147483648
        %v432 = vxor.u32 %v426, 2147483648
        %v433 = vxor.u32 %v429, 2147483648
        %v434 = vmul.f32 %v430, 1.442695
        %v435 = vpow.pop %v434
        %v436 = vmul.f32 %v431, 1.442695
        %v437 = vpow.pop %v436
        %v438 = vmul.f32 %v432, 1.442695
        %v439 = vpow.pop %v438
        %v440 = vmul.f32 %v433, 1.442695
        %v441 = vpow.pop %v440
        %v442 = vadd.f32 %v435, 1.0
        %v443 = vadd.f32 %v437, 1.0
        %v444 = vadd.f32 %v439, 1.0
        %v445 = vadd.f32 %v441, 1.0
        %v446 = vrcp.pop %v442
        %v447 = vmul.f32 1.0, %v446
        %v448 = vrcp.pop %v443
        %v449 = vmul.f32 1.0, %v448
        %v450 = vrcp.pop %v444
        %v451 = vmul.f32 1.0, %v450
        %v452 = vrcp.pop %v445
        %v453 = vmul.f32 1.0, %v452
        %v454 = vld [vmem:[%s166] sm:$0xff]
        %v455 = vld [vmem:[%s166 + $0x8] sm:$0xff]
        %v456 = vld [vmem:[%s166 + $0x10] sm:$0xff]
        %v457 = vld [vmem:[%s166 + $0x18] sm:$0xff]
        %v458 = vld [vmem:[%s166 + $0x20] sm:$0xff]
        %v459 = vld [vmem:[%s166 + $0x28] sm:$0xff]
        %v460 = vld [vmem:[%s166 + $0x30] sm:$0xff]
        %v461 = vld [vmem:[%s166 + $0x38] sm:$0xff]
        %v462 = vmul.f32 %v454, %v447
        %v463 = vmul.f32 %v455, %v447
        %v464 = vmul.f32 %v456, %v449
        %v465 = vmul.f32 %v457, %v449
        %v466 = vmul.f32 %v458, %v451
        %v467 = vmul.f32 %v459, %v451
        %v468 = vmul.f32 %v460, %v453
        %v469 = vmul.f32 %v461, %v453
        %470 = vst [vmem:[%s188] sm:$0xff] %v462
        %471 = vst [vmem:[%s188 + $0x8] sm:$0xff] %v463
        %472 = vst [vmem:[%s188 + $0x10] sm:$0xff] %v464
        %473 = vst [vmem:[%s188 + $0x18] sm:$0xff] %v465
        %474 = vst [vmem:[%s188 + $0x20] sm:$0xff] %v466
        %475 = vst [vmem:[%s188 + $0x28] sm:$0xff] %v467
        %476 = vst [vmem:[%s188 + $0x30] sm:$0xff] %v468
        %477 = vst [vmem:[%s188 + $0x38] sm:$0xff] %v469
        %s478 = sand.u32 %s96, 1
        %s479 = scalar_lea.sflag [#allocation4], %s478
        %s480 = sand.u32 %s96, 1
        %s481 = smul.addr %s480, 64
        %s482 = scalar_lea.vmem [#allocation5], %s481
        // Predicated region
        $region37: #{tpu_custom_call.1} parent=31 // pred_check
          %p483 = pneg %p106
        $region38: #{tpu_custom_call.1} parent=31 // pred_check_branch
          %485 = sbr.rel (%p483) target = $region40
        $region39: #{tpu_custom_call.1} parent=31 // pred_region
          %s487 = ssub.s32 1024, 1024
          %488 = vsyncadd %s479, %s487
          %s489 = smul.addr %s20, 8
          %s490 = smul.addr %s489, 128
          %s491 = scalar_lea.hbm %s3, %s490
          %s492 = sshll.u32 %s482, 4
          %s493 = int_to_ptr.vmem [resolvable:$true] %s492
          %498 = dma.vmem_to_hbm [thread:$0]  %s493, 1024, %s491, %s479, 256, 256, 16
        $region40: #{tpu_custom_call.1} parent=31 // pred_fallthru
          _
      $region32: #{tpu_custom_call.1} parent=5 // pred_fallthru
        _
      %p499 = scmp.le.s32.totalorder 2, %s15
      // Predicated region
      $region41: #{tpu_custom_call.1} parent=5 // pred_check
        %p500 = pneg %p499
      $region42: #{tpu_custom_call.1} parent=5 // pred_check_branch
        %502 = sbr.rel (%p500) target = $region44
      $region43: #{tpu_custom_call.1} parent=5 // pred_region
        %s503 = ssub.s32 %s15, 2
        // Predicated region
        $region45: #{tpu_custom_call.1} parent=43 // pred_check
          %p504 = pneg %p112
        $region46: #{tpu_custom_call.1} parent=43 // pred_check_branch
          %506 = sbr.rel (%p504) target = $region48
        $region47: #{tpu_custom_call.1} parent=43 // pred_region
          %s507 = sand.u32 %s97, 1
          %s508 = scalar_lea.sflag [#allocation4], %s507
          %s509 = sand.u32 %s97, 1
          %s510 = smul.addr %s509, 64
          %s511 = scalar_lea.vmem [#allocation5], %s510
          %512 = dma.done %s508, 1024
        $region48: #{tpu_custom_call.1} parent=43 // pred_fallthru
          _
      $region44: #{tpu_custom_call.1} parent=5 // pred_fallthru
        _
    $region6: #{tpu_custom_call.1} parent=1 // loop_footer
      %s19 = sadd.s32 1, %s15
    $region7: #{tpu_custom_call.1} parent=1 // loop_footer_branch
      %14 = sbr.rel target = $region3
    $region8: #{tpu_custom_call.1} parent=1 // loop_exit
      _
    %513 = vsyncpa [#allocation3], 1
    %s514 = scalar_lea.sflag [#allocation3], 1
    %515 = vsyncpa %s514, 1
    %516 = vsyncpa [#allocation4], 1
    %s517 = scalar_lea.sflag [#allocation4], 1
    %518 = vsyncpa %s517, 1

</llo_original>
